<compile_context>
chip_gen: v7x
topology: tpu7x:2x2x1
jax: 0.10.0
libtpu: 0.0.40
codegen_flags: <defaults>
</compile_context>

<pallas_src>
import jax
import jax.numpy as jnp
from jax.experimental import pallas as pl
from jax.experimental.pallas import tpu as pltpu

_LANE = 128    # vreg lane width (last dim)
_SUB_F32 = 8   # f32 sublane width (second-to-last dim)


def _round_up(x: int, m: int) -> int:
    return (x + m - 1) // m * m


def _round_down(x: int, m: int) -> int:
    return max(m, x // m * m)


def _linear_kernel(x_ref, w_ref, b_ref, o_ref):
    # x: (tm, dim)   w: (nb, dim)   b: (1, nb)   o: (tm, nb)
    acc = jax.lax.dot_general(
        x_ref[...], w_ref[...],
        dimension_numbers=(((1,), (1,)), ((), ())),   # contract over dim == x @ W^T
        preferred_element_type=jnp.float32)
    o_ref[...] = (acc + b_ref[...].astype(jnp.float32)).astype(o_ref.dtype)


def audio_embedder(patches, weight, bias, *, tile_m=None, tile_n=None, compute_dtype=None):
    """AudioEmbedder.forward: patches (..., dim) -> (..., embedding_dim).

    weight: (embedding_dim, dim), bias: (embedding_dim,) -- PyTorch nn.Linear layout.
    compute_dtype: optional dtype (e.g. jnp.bfloat16) for x/W in the matmul;
      accumulation stays f32 and the output keeps the input dtype.
    """
    dim = patches.shape[-1]
    emb, wk = weight.shape
    assert wk == dim and bias.shape == (emb,)
    lead = patches.shape[:-1]
    out_dtype = patches.dtype

    x = patches.reshape(-1, dim)
    M = x.shape[0]

    if compute_dtype is not None:
        x = x.astype(compute_dtype)
        weight = weight.astype(compute_dtype)
    b2 = bias.reshape(1, emb)                        # bias add stays in f32 in-kernel

    in_bytes = jnp.dtype(x.dtype).itemsize
    w_bytes = jnp.dtype(weight.dtype).itemsize
    b_bytes = jnp.dtype(b2.dtype).itemsize
    out_bytes = jnp.dtype(out_dtype).itemsize

    # dtype-aware sublane packing for tile_m rounding (8 f32 / 16 bf16 / 32 int8).
    sub = _SUB_F32 * max(1, 4 // in_bytes)

    # ---- VMEM budget from the chip (64 MiB v7x, 128 MiB v5e/v6e) -------------
    try:
        vmem_cap = int(pltpu.get_tpu_info().vmem_capacity_bytes)
    except Exception:
        vmem_cap = 64 * 1024 * 1024                  # conservative fallback, safe on every gen
    budget = vmem_cap // 2                           # headroom for Mosaic internal scratch

    # ---- weight residency vs. N tiling ----------------------------------------
    # Pallas allocates 2 buffers per input block, so count the slab twice.
    w_full_bytes = 2 * emb * dim * w_bytes + 2 * emb * b_bytes
    want_tiled_n = (tile_n is not None) and (tile_n < emb)
    use_resident = (not want_tiled_n) and (w_full_bytes <= budget // 2)

    if use_resident:
        n_blk = emb
        grid_n = 1
    else:
        if tile_n is None:
            # Largest lane-multiple weight slab using at most half the budget.
            per_n = 2 * dim * w_bytes + 2 * b_bytes
            tile_n = min(_round_down((budget // 2) // max(per_n, 1), _LANE), 1024)
        tile_n = max(_LANE, _round_up(int(tile_n), _LANE))
        tile_n = min(tile_n, _round_up(emb, _LANE))
        n_blk = tile_n
        grid_n = pl.cdiv(emb, tile_n)

    fixed = 2 * n_blk * dim * w_bytes + 2 * n_blk * b_bytes

    # ---- tile_m: biggest double-buffered x/out tile that fits the rest --------
    per_row = 2 * dim * in_bytes + 2 * n_blk * out_bytes
    if tile_m is None:
        tile_m = max(sub, max(budget - fixed, per_row * sub) // per_row)
        tile_m = min(tile_m, 1024)                   # mem-bound: bigger stops paying off
    tile_m = int(tile_m)
    if tile_m >= M:
        tile_m = M                                   # one tile covers all rows (full-dim block)
    else:
        tile_m = max(sub, tile_m // sub * sub)       # round DOWN: stay inside the budget
    grid_m = pl.cdiv(M, tile_m)

    vmem_needed = 2 * tile_m * dim * in_bytes + 2 * tile_m * n_blk * out_bytes + fixed
    vmem_limit = min(max(int(vmem_needed) + (4 << 20), 32 << 20), vmem_cap)

    cost = pl.CostEstimate(
        flops=2 * M * dim * emb,
        transcendentals=0,
        bytes_accessed=(grid_n * M * dim * in_bytes   # x read once per resident N slab
                        + emb * dim * w_bytes         # weight read exactly once
                        + emb * b_bytes
                        + M * emb * out_bytes),
    )

    if use_resident:
        grid = (grid_m,)
        in_specs = [
            pl.BlockSpec((tile_m, dim), lambda i: (i, 0)),   # x tile streams over M
            pl.BlockSpec((emb, dim), lambda i: (0, 0)),      # weight resident: one DMA
            pl.BlockSpec((1, emb), lambda i: (0, 0)),        # bias resident
        ]
        out_specs = pl.BlockSpec((tile_m, emb), lambda i: (i, 0))
        dim_sems = ("parallel",)
    else:
        # N outermost so the weight slab stays put across the inner M sweep.
        grid = (grid_n, grid_m)
        in_specs = [
            pl.BlockSpec((tile_m, dim), lambda j, i: (i, 0)),
            pl.BlockSpec((n_blk, dim), lambda j, i: (j, 0)),
            pl.BlockSpec((1, n_blk), lambda j, i: (0, j)),
        ]
        out_specs = pl.BlockSpec((tile_m, n_blk), lambda j, i: (i, j))
        dim_sems = ("parallel", "parallel")

    out = pl.pallas_call(
        _linear_kernel,
        out_shape=jax.ShapeDtypeStruct((M, emb), out_dtype),
        grid_spec=pl.GridSpec(grid=grid, in_specs=in_specs, out_specs=out_specs),
        compiler_params=pltpu.CompilerParams(
            dimension_semantics=dim_sems,
            vmem_limit_bytes=vmem_limit,
        ),
        cost_estimate=cost,
    )(x, weight, b2)

    return out.reshape(*lead, emb)


if __name__ == "__main__":
    # Small shapes consistent with the module: patches (batch, seq, dim)
    batch, seq, dim, embedding_dim = 2, 8, 32, 64

    key = jax.random.PRNGKey(0)
    k_x, k_w, k_b = jax.random.split(key, 3)

    patches = jax.random.normal(k_x, (batch, seq, dim), dtype=jnp.float32)

    # Deterministic parameter init mimicking nn.Linear: U(-1/sqrt(dim), 1/sqrt(dim))
    bound = 1.0 / (dim ** 0.5)
    weight = jax.random.uniform(k_w, (embedding_dim, dim), jnp.float32, -bound, bound)
    bias = jax.random.uniform(k_b, (embedding_dim,), jnp.float32, -bound, bound)

    out = jax.block_until_ready(audio_embedder(patches, weight, bias))

    # Reference check in plain JAX (same semantics as torch.nn.Linear forward)
    ref = patches @ weight.T + bias
    assert out.shape == (batch, seq, embedding_dim)
    assert jnp.allclose(out, ref, atol=1e-5, rtol=1e-5)

    # bf16 fast path (halves x/W HBM bytes, f32 accumulation) — looser tolerance.
    out_bf16 = jax.block_until_ready(
        audio_embedder(patches, weight, bias, compute_dtype=jnp.bfloat16))
    assert out_bf16.shape == (batch, seq, embedding_dim)
    assert jnp.allclose(out_bf16, ref, atol=5e-2, rtol=5e-2)

    print("KERNEL_OK")
</pallas_src>

<mosaic_0001>
module attributes {stable_mosaic.version = 11 : i64} {
  func.func @_linear_kernel(%arg0: i32, %arg1: memref<16x32xf32, #tpu.memory_space<vmem>>, %arg2: memref<64x32xf32, #tpu.memory_space<vmem>>, %arg3: memref<1x64xf32, #tpu.memory_space<vmem>>, %arg4: memref<16x64xf32, #tpu.memory_space<vmem>>) attributes {dimension_semantics = [#tpu.dimension_semantics<parallel>], iteration_bounds = array<i64: 1>, scalar_prefetch = 0 : i64, scratch_operands = 0 : i64, tpu.core_type = #tpu.core_type<tc>, window_params = [{transform_indices = @transform_0, window_bounds = array<i64: 16, 32>}, {pipeline_mode = #tpu.pipeline_mode<synchronous>, transform_indices = @transform_1, window_bounds = array<i64: 64, 32>}, {pipeline_mode = #tpu.pipeline_mode<synchronous>, transform_indices = @transform_2, window_bounds = array<i64: 1, 64>}, {transform_indices = @transform_3, window_bounds = array<i64: 16, 64>}]} {
    %c0 = arith.constant 0 : index
    %c0_0 = arith.constant 0 : index
    %0 = vector.load %arg1[%c0, %c0_0] : memref<16x32xf32, #tpu.memory_space<vmem>>, vector<16x32xf32>
    %c0_1 = arith.constant 0 : index
    %c0_2 = arith.constant 0 : index
    %1 = vector.load %arg2[%c0_1, %c0_2] : memref<64x32xf32, #tpu.memory_space<vmem>>, vector<64x32xf32>
    %cst = arith.constant dense<0.000000e+00> : vector<16x64xf32>
    %2 = tpu.matmul %0, %1, %cst {dimension_numbers = #tpu.dot_dimension_numbers<[1], [1], [0], [0], [0, 0, 1, 0], [], []>} : vector<16x32xf32>, vector<64x32xf32>, vector<16x64xf32> -> vector<16x64xf32>
    %c0_3 = arith.constant 0 : index
    %c0_4 = arith.constant 0 : index
    %3 = vector.load %arg3[%c0_3, %c0_4] : memref<1x64xf32, #tpu.memory_space<vmem>>, vector<1x64xf32>
    %4 = vector.broadcast %3 : vector<1x64xf32> to vector<16x64xf32>
    %5 = arith.addf %2, %4 : vector<16x64xf32>
    %c0_5 = arith.constant 0 : index
    %c0_6 = arith.constant 0 : index
    %6 = vector.load %arg4[%c0_5, %c0_6] : memref<16x64xf32, #tpu.memory_space<vmem>>, vector<16x64xf32>
    tpu.vector_store %arg4[%c0_5, %c0_6], %5 {strides = array<i32>} : memref<16x64xf32, #tpu.memory_space<vmem>>, vector<16x64xf32>,
    return
  }
  func.func @transform_0(%arg0: i32) -> (i32, i32) {
    %c0_i32 = arith.constant 0 : i32
    %c0_i32_0 = arith.constant 0 : i32
    return %arg0, %c0_i32 : i32, i32
  }
  func.func @transform_1(%arg0: i32) -> (i32, i32) {
    %c0_i32 = arith.constant 0 : i32
    %c0_i32_0 = arith.constant 0 : i32
    %c0_i32_1 = arith.constant 0 : i32
    return %c0_i32, %c0_i32_0 : i32, i32
  }
  func.func @transform_2(%arg0: i32) -> (i32, i32) {
    %c0_i32 = arith.constant 0 : i32
    %c0_i32_0 = arith.constant 0 : i32
    %c0_i32_1 = arith.constant 0 : i32
    return %c0_i32, %c0_i32_0 : i32, i32
  }
  func.func @transform_3(%arg0: i32) -> (i32, i32) {
    %c0_i32 = arith.constant 0 : i32
    %c0_i32_0 = arith.constant 0 : i32
    return %arg0, %c0_i32 : i32, i32
  }
}

</mosaic_0001>

<llo_original>
// kernel: tpu_custom_call.1
$region0: #{tpu_custom_call.1}
  #allocation0 [shape = 'u32[]', space=smem, size = 0x4, offset = 0x4, fixed_abs, tag = 'smem constant byte address 0x4 - core index']
  #allocation1 [shape = 'u32[144,128]{1,0:T(1,128)}', space=vmem, size = 0x12000, scoped, tag = 'internal scratch']
  %s0 = inlined_call_operand.vmem [shape: f32[16,32], index: 0, kind: input, shape index: {}]
  %s1 = inlined_call_operand.vmem [shape: f32[64,32], index: 1, kind: input, shape index: {}]
  %s2 = inlined_call_operand.vmem [shape: f32[1,64], index: 2, kind: input, shape index: {}]
  %s3 = inlined_call_operand.hbm [shape: f32[16,64], index: 3, kind: output, shape index: {}]
  %s4 = sld [smem:[#allocation0]]
  $region22: #{tpu_custom_call.1} parent=0
    _
  %s6 = ssub.s32 1, %s4
  %s7 = scalar_select 0, %s6, %s4
  $region1: #{tpu_custom_call.1} parent=0
    #allocation2 [shape = 'u8[8192]{0}', space=vmem, size = 0x2000, scoped, tag = 'output window, operand 0, single buffered']
    #allocation3 [shape = 's32[1]{0}', space=sflag, size = 0x4, scoped, tag = 'scoped memory for tpu_custom_call.1']
    %8 = vsyncpa [#allocation3], 0
    // Predicated region
    $region2: #{tpu_custom_call.1} parent=1 // pred_check
      _
    $region3: #{tpu_custom_call.1} parent=1 // pred_check_branch
      %10 = sbr.rel (0) target = $region5
    $region4: #{tpu_custom_call.1} parent=1 // pred_region
      _
    $region5: #{tpu_custom_call.1} parent=1 // pred_fallthru
      _
    // Predicated region
    $region6: #{tpu_custom_call.1} parent=1 // pred_check
      _
    $region7: #{tpu_custom_call.1} parent=1 // pred_check_branch
      %12 = sbr.rel (0) target = $region9
    $region8: #{tpu_custom_call.1} parent=1 // pred_region
      _
    $region9: #{tpu_custom_call.1} parent=1 // pred_fallthru
      _
    // Predicated region
    $region10: #{tpu_custom_call.1} parent=1 // pred_check
      _
    $region11: #{tpu_custom_call.1} parent=1 // pred_check_branch
      %14 = sbr.rel (0) target = $region13
    $region12: #{tpu_custom_call.1} parent=1 // pred_region
      _
    $region13: #{tpu_custom_call.1} parent=1 // pred_fallthru
      _
    %v15 = vld [vmem:[%s0] sm:$0xff]
    %v16 = vld [vmem:[%s0 + $0x8] sm:$0xff]
    %v17 = vld [vmem:[%s1] sm:$0xff]
    %v18 = vld [vmem:[%s1 + $0x8] sm:$0xff]
    %v19 = vld [vmem:[%s1 + $0x10] sm:$0xff]
    %v20 = vld [vmem:[%s1 + $0x18] sm:$0xff]
    %v21 = vld [vmem:[%s1 + $0x20] sm:$0xff]
    %v22 = vld [vmem:[%s1 + $0x28] sm:$0xff]
    %v23 = vld [vmem:[%s1 + $0x30] sm:$0xff]
    %v24 = vld [vmem:[%s1 + $0x38] sm:$0xff]
    %v25 = vld [vmem:[%s2] sm:$0x1]
    %v27 = vlaneseq
    %v28 = vshrl.u32 %v27, 7
    %v29 = vsub.s32 0, %v28
    %v30 = vrot.slane %v25, %v29
    %vm32 = vcmask 261120
    %v34 = vsel %vm32, %v15, 0
    %v37 = vsel %vm32, %v16, 0
    %v40 = vsel %vm32, %v17, 0
    %v43 = vsel %vm32, %v18, 0
    %v46 = vsel %vm32, %v19, 0
    %v49 = vsel %vm32, %v20, 0
    %v52 = vsel %vm32, %v21, 0
    %v55 = vsel %vm32, %v22, 0
    %v58 = vsel %vm32, %v23, 0
    %v61 = vsel %vm32, %v24, 0
    %63 = vmatprep.subr.mxu0 0.0
    %64 = vmatpush1.xpose.msra.mxu0 %v40
    %65 = vmatprep.subr.mxu0 0.0
    %66 = vmatpush1.xpose.msra.mxu0 %v43
    %67 = vmatprep.subr.mxu0 0.0
    %68 = vmatpush1.xpose.msra.mxu0 %v46
    %69 = vmatprep.subr.mxu0 0.0
    %70 = vmatpush1.xpose.msra.mxu0 %v49
    %71 = vmatprep.subr.mxu0 0.0
    %72 = vmatpush1.xpose.msra.mxu0 %v52
    %73 = vmatprep.subr.mxu0 0.0
    %74 = vmatpush1.xpose.msra.mxu0 %v55
    %75 = vmatprep.subr.mxu0 0.0
    %76 = vmatpush1.xpose.msra.mxu0 %v58
    %77 = vmatprep.subr.mxu0 0.0
    %78 = vmatpush1.xpose.msra.mxu0 %v61
    %79 = vmatprep.subr.mxu0 0.0
    %80 = vmatpush1.xpose.msra.mxu0 0.0
    %81 = vmatprep.subr.mxu0 0.0
    %82 = vmatpush1.xpose.msra.mxu0 0.0
    %83 = vmatprep.subr.mxu0 0.0
    %84 = vmatpush1.xpose.msra.mxu0 0.0
    %85 = vmatprep.subr.mxu0 0.0
    %86 = vmatpush1.xpose.msra.mxu0 0.0
    %87 = vmatprep.subr.mxu0 0.0
    %88 = vmatpush1.xpose.msra.mxu0 0.0
    %89 = vmatprep.subr.mxu0 0.0
    %90 = vmatpush1.xpose.msra.mxu0 0.0
    %91 = vmatprep.subr.mxu0 0.0
    %92 = vmatpush1.xpose.msra.mxu0 0.0
    %93 = vmatprep.subr.mxu0 0.0
    %94 = vmatpush1.xpose.msra.mxu0 0.0
    %95 = vmatprep.subr.mxu0 0.0
    %96 = vmatpush1.xpose.msra.mxu0 0.0
    %97 = vmatprep.subr.mxu0 0.0
    %98 = vmatpush1.xpose.msra.mxu0 0.0
    %99 = vmatprep.subr.mxu0 0.0
    %100 = vmatpush1.xpose.msra.mxu0 0.0
    %101 = vmatprep.subr.mxu0 0.0
    %102 = vmatpush1.xpose.msra.mxu0 0.0
    %103 = vmatprep.subr.mxu0 0.0
    %104 = vmatpush1.xpose.msra.mxu0 0.0
    %105 = vmatprep.subr.mxu0 0.0
    %106 = vmatpush1.xpose.msra.mxu0 0.0
    %107 = vmatprep.subr.mxu0 0.0
    %108 = vmatpush1.xpose.msra.mxu0 0.0
    %109 = vmatprep.subr.mxu0 0.0
    %110 = vmatpush1.xpose.msra.mxu0 0.0
    %111 = vmatprep.subr.mxu0 0.0
    %112 = vmatpush1.xpose.msra.mxu0 0.0
    %113 = vmatprep.subr.mxu0 0.0
    %114 = vmatpush1.xpose.msra.mxu0 0.0
    %115 = vmatprep.subr.mxu0 0.0
    %116 = vmatpush1.xpose.msra.mxu0 0.0
    %117 = vmatprep.subr.mxu0 0.0
    %118 = vmatpush1.xpose.msra.mxu0 0.0
    %119 = vmatprep.subr.mxu0 0.0
    %120 = vmatpush1.xpose.msra.mxu0 0.0
    %121 = vmatprep.subr.mxu0 0.0
    %122 = vmatpush1.xpose.msra.mxu0 0.0
    %123 = vmatprep.subr.mxu0 0.0
    %124 = vmatpush1.xpose.msra.mxu0 0.0
    %125 = vmatprep.subr.mxu0 0.0
    %126 = vmatpush1.xpose.msra.mxu0 0.0
    %127 = vmatprep.mubr.f32.mxu0 0.0
    %128 = vmatmul.mubr.f32.gmra.mrb[0].mxu0 %v34
    %v129 = vpop.f32.mrb[0].mxu0
    %v130 = vadd.f32 %v30, %v129
    %v131 = vpop.f32.mrb[0].mxu0
    %132 = vmatprep.mubr.f32.mxu0 0.0
    %133 = vmatmul.mubr.f32.gmra.mrb[0].mxu0 %v37
    %v134 = vpop.f32.mrb[0].mxu0
    %v135 = vadd.f32 %v30, %v134
    %v136 = vpop.f32.mrb[0].mxu0
    %137 = vdwg.mxu0
    %vm138 = vcmask 523264
    %139 = vst.msk [vmem:[#allocation2] sm:$0xff] %vm138, %v130
    %140 = vst.msk [vmem:[#allocation2 + $0x8] sm:$0xff] %vm138, %v135
    // Predicated region
    $region14: #{tpu_custom_call.1} parent=1 // pred_check
      _
    $region15: #{tpu_custom_call.1} parent=1 // pred_check_branch
      %142 = sbr.rel (0) target = $region17
    $region16: #{tpu_custom_call.1} parent=1 // pred_region
      %s144 = ssub.s32 256, 256
      %145 = vsyncadd [#allocation3], %s144
      %s146 = sshll.u32 [#allocation2], 4
      %s147 = int_to_ptr.vmem [resolvable:$true] %s146
      %152 = dma.vmem_to_hbm [thread:$0]  %s147, 256, %s3, [#allocation3], 128, 128, 8
    $region17: #{tpu_custom_call.1} parent=1 // pred_fallthru
      _
    // Predicated region
    $region18: #{tpu_custom_call.1} parent=1 // pred_check
      _
    $region19: #{tpu_custom_call.1} parent=1 // pred_check_branch
      %154 = sbr.rel (0) target = $region21
    $region20: #{tpu_custom_call.1} parent=1 // pred_region
      %155 = dma.done [#allocation3], 256
    $region21: #{tpu_custom_call.1} parent=1 // pred_fallthru
      _
    %156 = vsyncpa [#allocation3], 1

</llo_original>
